<compile_context>
chip_gen: v5e
topology: v5e:2x2
jax: 0.10.0
libtpu: 0.0.40
codegen_flags: <defaults>
</compile_context>

<pallas_src>
import functools

import jax
import jax.numpy as jnp
from jax.experimental import pallas as pl
from jax.experimental.pallas import tpu as pltpu


# ---------------------------------------------------------------------------
# Standalone forward:  out = weight[:length]   (single HBM -> HBM DMA)
# ---------------------------------------------------------------------------

def _dma_row_slice_kernel(length, w_hbm, out_hbm, sem):
    # One DMA of the first `length` rows (a contiguous byte range) straight
    # from the table in HBM to the output in HBM.  Zero compute, zero VMEM.
    cp = pltpu.make_async_copy(w_hbm.at[pl.ds(0, length), :], out_hbm, sem)
    cp.start()
    cp.wait()


_XLA_FAST_PATH_BYTES = 1 << 20  # below ~1 MiB a plain XLA slice is faster


@functools.partial(jax.jit, static_argnames=("length", "force_pallas"))
def absolute_positional_embedding(weight: jax.Array, length: int,
                                  *, force_pallas: bool = False) -> jax.Array:
    """Equivalent of AbsolutePositionalEmbedding.forward(length)."""
    max_length, dim = weight.shape
    if length > max_length:
        raise ValueError(f"length={length} exceeds max_length={max_length}")

    itemsize = jnp.dtype(weight.dtype).itemsize
    out_bytes = length * dim * itemsize

    # Tiny requests: pallas_call launch overhead dominates; XLA slice wins.
    if (not force_pallas) and out_bytes < _XLA_FAST_PATH_BYTES:
        return jax.lax.slice(weight, (0, 0), (length, dim))

    return pl.pallas_call(
        functools.partial(_dma_row_slice_kernel, length),
        out_shape=jax.ShapeDtypeStruct((length, dim), weight.dtype),
        in_specs=[pl.BlockSpec(memory_space=pl.ANY)],   # weight stays in HBM
        out_specs=pl.BlockSpec(memory_space=pl.ANY),    # output written by DMA
        scratch_shapes=[pltpu.SemaphoreType.DMA],
        cost_estimate=pl.CostEstimate(
            flops=0, transcendentals=0, bytes_accessed=2 * out_bytes),
    )(weight)


# ---------------------------------------------------------------------------
# Fused-consumer variant:  out = tokens + weight[:length]
# (the form you actually want in a model; saves a full (length, dim) HBM
#  round-trip versus copy-then-add)
# ---------------------------------------------------------------------------

def _add_pos_kernel(w_ref, tok_ref, out_ref):
    out_ref[...] = tok_ref[...] + w_ref[...].astype(out_ref.dtype)


def _sublane_multiple(dtype) -> int:
    # 8 rows for 32-bit, 16 for bf16/f16, 32 for int8/fp8 sublane packing.
    itemsize = jnp.dtype(dtype).itemsize
    return max(8, 32 // max(itemsize, 1))


def _pick_blocks(length: int, dim: int, dtype, n_streams: int,
                 vmem_budget_bytes: int = 8 * 1024 * 1024):
    """(row_block, dim_block): largest aligned blocks within the VMEM budget.

    `n_streams` live block streams, each double-buffered by the pipeline
    (e.g. 3 streams -> 6 live blocks).  8 MiB budget keeps us safely under
    the 16 MiB scoped-VMEM default on v5e and well under v7x's 64 MiB VMEM.
    """
    sub = _sublane_multiple(dtype)
    itemsize = jnp.dtype(dtype).itemsize
    live = 2 * n_streams  # double-buffering

    # Prefer keeping the full dim as one lane-dense block.
    dim_block = dim
    max_rows = (vmem_budget_bytes // (live * dim_block * itemsize)) // sub * sub
    if max_rows >= sub:
        rows = min(512, max_rows)
    else:
        # Very wide embedding: tile the lane axis in 128-lane multiples too,
        # keeping stores unmasked and pipelining alive.
        rows = sub
        max_lanes = vmem_budget_bytes // (live * rows * itemsize)
        dim_block = min(dim, max(128, (max_lanes // 128) * 128))

    length_rounded = ((length + sub - 1) // sub) * sub
    rows = min(rows, length_rounded)

    # v7x: if a single row block would cover everything but the output spans
    # >= 2 sublane groups, split so the "parallel" axis feeds both TCs.
    if rows >= length_rounded and length_rounded >= 2 * sub:
        half = ((length_rounded // 2 + sub - 1) // sub) * sub
        rows = min(rows, half)

    return max(rows, sub), dim_block


@jax.jit
def absolute_positional_embedding_add(weight: jax.Array,
                                      tokens: jax.Array) -> jax.Array:
    """Fused tokens + positional_embedding[:length]; length = tokens.shape[0]."""
    length, dim = tokens.shape
    max_length, wdim = weight.shape
    if wdim != dim:
        raise ValueError(f"dim mismatch: weight {wdim} vs tokens {dim}")
    if length > max_length:
        raise ValueError(f"length={length} exceeds max_length={max_length}")

    row_block, dim_block = _pick_blocks(length, dim, tokens.dtype, n_streams=3)
    grid = (pl.cdiv(length, row_block), pl.cdiv(dim, dim_block))
    itemsize = jnp.dtype(tokens.dtype).itemsize

    return pl.pallas_call(
        _add_pos_kernel,
        out_shape=jax.ShapeDtypeStruct((length, dim), tokens.dtype),
        grid=grid,
        in_specs=[
            # Weight tiled with the SAME block index as the output: only the
            # first `length` rows of the table are ever DMA'd.
            pl.BlockSpec((row_block, dim_block), lambda i, j: (i, j)),
            pl.BlockSpec((row_block, dim_block), lambda i, j: (i, j)),
        ],
        out_specs=pl.BlockSpec((row_block, dim_block), lambda i, j: (i, j)),
        compiler_params=pltpu.CompilerParams(
            dimension_semantics=("parallel", "parallel")),
        cost_estimate=pl.CostEstimate(
            flops=length * dim, transcendentals=0,
            bytes_accessed=3 * length * dim * itemsize),
    )(weight, tokens)


if __name__ == "__main__":
    key = jax.random.PRNGKey(0)
    k_w, k_w2, k_tok = jax.random.split(key, 3)

    # --- Standalone path (single HBM->HBM DMA), small shapes ---------------
    max_length, dim_encoding, length = 16, 128, 8
    # nn.Embedding default init is N(0, 1).
    weight = jax.random.normal(k_w, (max_length, dim_encoding), dtype=jnp.float32)

    out = jax.block_until_ready(
        absolute_positional_embedding(weight, length, force_pallas=True))
    assert out.shape == (length, dim_encoding) and out.dtype == weight.dtype
    assert bool(jnp.allclose(out, weight[:length])), "DMA path mismatch"

    # XLA fast path agrees with the kernel.
    out_fast = jax.block_until_ready(absolute_positional_embedding(weight, length))
    assert bool(jnp.allclose(out_fast, weight[:length])), "fast path mismatch"

    # --- Ragged length close to max_length (robustness check) --------------
    max_length2, dim2, length2 = 40, 256, 37
    weight2 = jax.random.normal(k_w2, (max_length2, dim2), dtype=jnp.float32)
    out2 = jax.block_until_ready(
        absolute_positional_embedding(weight2, length2, force_pallas=True))
    assert out2.shape == (length2, dim2)
    assert bool(jnp.allclose(out2, weight2[:length2])), "ragged case mismatch"

    # --- Fused consumer variant: tokens + pos[:length] ----------------------
    tokens = jax.random.normal(k_tok, (length, dim_encoding), dtype=jnp.float32)
    fused = jax.block_until_ready(absolute_positional_embedding_add(weight, tokens))
    assert fused.shape == tokens.shape
    assert bool(jnp.allclose(fused, tokens + weight[:length])), "fused mismatch"

    print("KERNEL_OK")
</pallas_src>

<mosaic_0001>
module attributes {stable_mosaic.version = 11 : i64} {
  func.func @_dma_row_slice_kernel(%arg0: memref<16x128xf32, #tpu.memory_space<any>>, %arg1: memref<8x128xf32, #tpu.memory_space<any>>, %arg2: memref<!tpu.dma_semaphore, #tpu.memory_space<semaphore_mem>>) attributes {dimension_semantics = [], scalar_prefetch = 0 : i64, scratch_operands = 1 : i64, tpu.core_type = #tpu.core_type<tc>} {
    %c0_i32 = arith.constant 0 : i32
    %c0_i32_0 = arith.constant 0 : i32
    %0 = tpu.memref_slice %arg0[%c0_i32, %c0_i32_0] : memref<16x128xf32, #tpu.memory_space<any>> -> memref<8x128xf32, #tpu.memory_space<any>>
    tpu.enqueue_dma source(%0 : memref<8x128xf32, #tpu.memory_space<any>>) target(%arg1 : memref<8x128xf32, #tpu.memory_space<any>>) target_semaphore(%arg2 : memref<!tpu.dma_semaphore, #tpu.memory_space<semaphore_mem>>)
    %c0_i32_1 = arith.constant 0 : i32
    %c0_i32_2 = arith.constant 0 : i32
    %1 = tpu.memref_slice %arg0[%c0_i32_1, %c0_i32_2] : memref<16x128xf32, #tpu.memory_space<any>> -> memref<8x128xf32, #tpu.memory_space<any>>
    tpu.wait_dma2 semaphore(%arg2 : memref<!tpu.dma_semaphore, #tpu.memory_space<semaphore_mem>>) src(%1 : memref<8x128xf32, #tpu.memory_space<any>>) dst(%arg1 : memref<8x128xf32, #tpu.memory_space<any>>)
    return
  }
}

</mosaic_0001>

<llo_original>
// kernel: absolute_positional_embedding.1
$region0: #{absolute_positional_embedding.1}
  #allocation0 [shape = 'u32[]', space=smem, size = 0x4, offset = 0x4, fixed_abs, tag = 'smem constant byte address 0x4 - core index']
  #allocation1 [shape = 'u32[72,128]{1,0:T(1,128)}', space=vmem, size = 0x9000, scoped, tag = 'internal scratch']
  #allocation2 [shape = 's32[1]{0}', space=sflag, size = 0x4, scoped, tag = 'scratch operand']
  #allocation3 [shape = 's32[]', space=sflag, size = 0x4, offset = 0, fixed_abs, tag = 'sflag constant byte address 0x0 - dummy sync flag']
  #allocation4 [shape = 'u32[0]{0}', space=smem, size = 0, offset = 0, fixed_abs, tag = 'smem constant byte address 0x0 - null']
  %s0 = inlined_call_operand.hbm [shape: f32[16,128], index: 0, kind: input, shape index: {}]
  %s1 = inlined_call_operand.hbm [shape: f32[8,128], index: 1, kind: output, shape index: {}]
  %s2 = sld [smem:[#allocation0]]
  $region2: #{absolute_positional_embedding.1} parent=0
    _
  %s4 = ssub.s32 1, %s2
  %s5 = scalar_select 0, %s4, %s2
  %s7 = sshll.u32 1, 14
  %s8 = sxor.u32 4294967295, %s7
  %s10 = sshll.u32 %s0, 4
  %s11 = int_to_ptr.hbm [resolvable:$true] %s10
  %s12 = sshll.u32 %s1, 4
  %s13 = int_to_ptr.hbm [resolvable:$true] %s12
  %16 = dma.general %s11, 128, %s13, [#allocation2], [#allocation3], [#allocation4], 0, 0
  %s17 = smul.u32 8, 1
  %s18 = sshll.u32 %s17, 4
  %19 = dma.done [#allocation2], %s18
  %20 = vsyncmov [#allocation2]
  %s21 = vpop.sfrf %20
  %p22 = scmp.eq.s32.totalorder %s21, 0
  %p23 = pneg %p22
  %25 = shalt.err (%p23)

</llo_original>
